<compile_context>
chip_gen: v5e
topology: v5e:2x2
jax: 0.10.0
libtpu: 0.0.40
codegen_flags: <defaults>
</compile_context>

<pallas_src>
import functools

import jax
import jax.numpy as jnp
from jax.experimental import pallas as pl
from jax.experimental.pallas import tpu as pltpu

LANES = 128
SUBLANES = 8
MAX_FRAME_TILE = 256     # STFT frames per grid step for the spectral kernel


def _cdiv(a, b):
    return -(-a // b)


def _round_up(a, b):
    return _cdiv(a, b) * b


@functools.lru_cache(maxsize=1)
def _is_v7x():
    """Best-effort detection of a dual-TensorCore (v7x-class) chip."""
    try:
        kind = jax.devices()[0].device_kind.lower()
    except Exception:
        return False
    return ("v7" in kind) or ("tpu7" in kind)


# ----------------------------------------------------------------------------
# Kernel 1: streaming mean((a - b)^2), also emitting d = a - b
# ----------------------------------------------------------------------------
def _mse_diff_kernel(a_ref, b_ref, d_ref, out_ref, acc_ref, *, n_rows,
                     row_tile, blocks_per_core, n_full_blocks, has_tail,
                     has_phantom, inv_n):
    p = pl.program_id(0)   # core split (CORE_PARALLEL on v7x, size 1 elsewhere)
    i = pl.program_id(1)   # row-block stream ("arbitrary")

    @pl.when(i == 0)
    def _():
        acc_ref[...] = jnp.zeros_like(acc_ref)

    d = a_ref[...].astype(jnp.float32) - b_ref[...].astype(jnp.float32)
    d_ref[...] = d.astype(d_ref.dtype)        # difference, reused by diff2
    sq = d * d
    sq3 = sq.reshape(row_tile // SUBLANES, SUBLANES, LANES)

    if not has_tail and not has_phantom:
        # Fast path: every block is full and real -> pure VPU accumulate.
        acc_ref[...] += jnp.sum(sq3, axis=0)
    else:
        block_idx = p * blocks_per_core + i

        # Interior (full) blocks: unmasked accumulate.
        @pl.when(block_idx < n_full_blocks)
        def _():
            acc_ref[...] += jnp.sum(sq3, axis=0)

        if has_tail:
            # Only the single real tail block pays the iota/compare/where.
            @pl.when(block_idx == n_full_blocks)
            def _():
                row_ids = (jax.lax.broadcasted_iota(
                    jnp.int32, (row_tile, LANES), 0)
                    + n_full_blocks * row_tile)
                masked = jnp.where(row_ids < n_rows, sq, 0.0)
                acc_ref[...] += jnp.sum(
                    masked.reshape(row_tile // SUBLANES, SUBLANES, LANES),
                    axis=0)
        # block_idx beyond the last real block (phantom, clamped index_map):
        # skip accumulation; its d write repeats identical data harmlessly.

    @pl.when(i == pl.num_programs(1) - 1)
    def _():
        # One cross-lane/sublane reduce + scale + SMEM store, per core.
        out_ref[0, 0] = jnp.sum(acc_ref[...]) * jnp.float32(inv_n)


def mse_and_diff(a, b):
    """One streaming pass over a and b: (mean((a-b)^2), (a-b) as float32)."""
    assert a.shape == b.shape, "out and y must have identical shapes"
    n = a.size
    flat_a = a.reshape(-1)
    flat_b = b.reshape(-1)
    if n % LANES != 0:
        # Rare fallback: pad only up to the next 128-lane row (<128 elements).
        pad = (-n) % LANES
        flat_a = jnp.pad(flat_a, (0, pad))
        flat_b = jnp.pad(flat_b, (0, pad))
    rows = flat_a.size // LANES
    a2 = flat_a.reshape(rows, LANES)     # reshape of contiguous data: no copy
    b2 = flat_b.reshape(rows, LANES)

    is_v7x = _is_v7x()
    max_row_tile = 4096 if is_v7x else 2048       # 2 MiB vs 1 MiB per input
    row_tile = min(max_row_tile, _round_up(rows, SUBLANES))
    n_full_blocks = rows // row_tile
    has_tail = (rows % row_tile) != 0
    total_blocks = n_full_blocks + int(has_tail)

    num_cores = 2 if (is_v7x and total_blocks >= 2) else 1   # 1 on v5e/v6e
    blocks_per_core = _cdiv(total_blocks, num_cores)
    has_phantom = num_cores * blocks_per_core > total_blocks

    def row_block_map(p, i):
        # Clamp phantom blocks back in range; they are skipped in the kernel.
        return (jnp.minimum(p * blocks_per_core + i, total_blocks - 1), 0)

    kernel = functools.partial(
        _mse_diff_kernel, n_rows=rows, row_tile=row_tile,
        blocks_per_core=blocks_per_core, n_full_blocks=n_full_blocks,
        has_tail=has_tail, has_phantom=has_phantom, inv_n=1.0 / float(n))

    if num_cores == 2:
        dims = (pltpu.CORE_PARALLEL, "arbitrary")   # guarantee the 2-TC split
    else:
        dims = ("arbitrary", "arbitrary")

    itemsize = a2.dtype.itemsize
    d_rows, partials = pl.pallas_call(
        kernel,
        out_shape=(jax.ShapeDtypeStruct((rows, LANES), jnp.float32),
                   jax.ShapeDtypeStruct((num_cores, 1), jnp.float32)),
        grid_spec=pltpu.PrefetchScalarGridSpec(
            num_scalar_prefetch=0,
            grid=(num_cores, blocks_per_core),
            in_specs=[pl.BlockSpec((row_tile, LANES), row_block_map),
                      pl.BlockSpec((row_tile, LANES), row_block_map)],
            out_specs=(pl.BlockSpec((row_tile, LANES), row_block_map),
                       pl.BlockSpec((1, 1), lambda p, i: (p, 0),
                                    memory_space=pltpu.SMEM)),
            scratch_shapes=[pltpu.VMEM((SUBLANES, LANES), jnp.float32)],
        ),
        compiler_params=pltpu.CompilerParams(
            dimension_semantics=dims,
            vmem_limit_bytes=32 * 1024 * 1024,
        ),
        cost_estimate=pl.CostEstimate(
            flops=int(3 * n), transcendentals=0,
            bytes_accessed=int(rows * LANES * (2 * itemsize + 4)
                               + 4 * num_cores)),
    )(a2, b2)

    mse = jnp.sum(partials)
    d = d_rows.reshape(-1)[:n].reshape(a.shape)
    return mse, d


# ----------------------------------------------------------------------------
# Kernel 2: sum((Re STFT(out) - Re STFT(y))^2) == sum((Re STFT(out - y))^2)
# ----------------------------------------------------------------------------
def _hann_periodic(n):
    return 0.5 - 0.5 * jnp.cos(
        2.0 * jnp.pi * jnp.arange(n, dtype=jnp.float32) / n)


def _stft_frames(x, win_size):
    """Overlapping frames matching scipy.signal.stft defaults
    (noverlap=win//2, boundary='zeros', padded=True).  Returns (M, win)."""
    x = x.astype(jnp.float32)
    hop = win_size - win_size // 2
    lead = [(0, 0)] * (x.ndim - 1)
    x = jnp.pad(x, lead + [(win_size // 2, win_size // 2)])
    nadd = (-(x.shape[-1] - win_size) % hop) % win_size
    if nadd:
        x = jnp.pad(x, lead + [(0, nadd)])
    n_frames = (x.shape[-1] - win_size) // hop + 1
    idx = jnp.arange(n_frames)[:, None] * hop + jnp.arange(win_size)[None, :]
    frames = x[..., idx]                          # (..., n_frames, win)
    return frames.reshape(-1, win_size)


def _stft_real_basis(win_size, n_freq_pad=None):
    """Windowed cosine-DFT basis: Re(STFT(x)) = frames(x) @ basis
    (scipy 'spectrum' scaling = 1 / sum(hann)).  Optional zero-column pad."""
    w = _hann_periodic(win_size)
    n = jnp.arange(win_size, dtype=jnp.float32)
    f = jnp.arange(win_size // 2 + 1, dtype=jnp.float32)
    cos_m = jnp.cos(2.0 * jnp.pi * jnp.outer(n, f) / win_size)
    basis = (w[:, None] * cos_m) / jnp.sum(w)     # (win, n_freq)
    if n_freq_pad is not None and n_freq_pad > basis.shape[1]:
        basis = jnp.pad(basis, ((0, 0), (0, n_freq_pad - basis.shape[1])))
    return basis


def _stft_ssd_kernel(f_ref, c_ref, out_ref, acc_ref):
    i = pl.program_id(0)

    @pl.when(i == 0)
    def _():
        acc_ref[...] = jnp.zeros_like(acc_ref)

    s = jnp.dot(f_ref[...], c_ref[...],
                preferred_element_type=jnp.float32,
                precision=jax.lax.Precision.HIGHEST)
    acc_ref[...] += s * s                          # lane-dense (128-wide)

    @pl.when(i == pl.num_programs(0) - 1)
    def _():
        out_ref[0, 0] = jnp.sum(acc_ref[...])


def stft_real_sq_diff_sum(d, win_size):
    """sum of squared real-STFT coefficients of the difference signal d."""
    # TODO(synk): frames of d are still materialized by a wrapper-side gather;
    # in-kernel slab framing (pl.ANY signal + overlapping VMEM slices) would
    # remove that HBM round trip for long signals.
    fd = _stft_frames(d, win_size)
    n_freq = win_size // 2 + 1
    n_freq_pad = _round_up(n_freq, LANES)          # pad to 128: lane-dense acc
    basis = _stft_real_basis(win_size, n_freq_pad)  # (win, 128), zero cols = 0

    m = fd.shape[0]
    tile_m = min(MAX_FRAME_TILE, _round_up(m, SUBLANES))
    m_pad = _round_up(m, tile_m)
    if m_pad != m:
        fd = jnp.pad(fd, ((0, m_pad - m), (0, 0)))  # zero frames contribute 0

    res = pl.pallas_call(
        _stft_ssd_kernel,
        out_shape=jax.ShapeDtypeStruct((1, 1), jnp.float32),
        grid_spec=pltpu.PrefetchScalarGridSpec(
            num_scalar_prefetch=0,
            grid=(m_pad // tile_m,),
            in_specs=[pl.BlockSpec((tile_m, win_size), lambda i: (i, 0)),
                      pl.BlockSpec((win_size, n_freq_pad), lambda i: (0, 0))],
            out_specs=pl.BlockSpec((1, 1), lambda i: (0, 0),
                                   memory_space=pltpu.SMEM),
            scratch_shapes=[pltpu.VMEM((tile_m, n_freq_pad), jnp.float32)],
        ),
        compiler_params=pltpu.CompilerParams(
            dimension_semantics=("arbitrary",),
            vmem_limit_bytes=32 * 1024 * 1024,
        ),
        cost_estimate=pl.CostEstimate(
            flops=int(2 * m_pad * win_size * n_freq_pad
                      + 3 * m_pad * n_freq_pad),
            transcendentals=0,
            bytes_accessed=int((m_pad * win_size
                                + win_size * n_freq_pad) * 4 + 4)),
    )(fd, basis)
    return res[0, 0]


# ----------------------------------------------------------------------------
# Module wrapper
# ----------------------------------------------------------------------------
class DiffSTFT:
    """Pallas TPU port of lib/loss_function.py::diff_stft.forward."""

    def __init__(self, srate, win_size):
        # srate only parameterizes scipy's returned f/t axes; it does not
        # affect the loss value itself.
        self.srate = srate
        self.win = win_size

    def __call__(self, out, y):
        diff1, d = mse_and_diff(out, y)            # mean((out-y)^2), out-y
        diff2 = stft_real_sq_diff_sum(d, self.win)  # sum((Re S1 - Re S2)^2)
        return diff1 + diff2


if __name__ == "__main__":
    key = jax.random.PRNGKey(0)
    k1, k2 = jax.random.split(key)
    srate, win_size = 16000, 64
    out = jax.random.normal(k1, (2, 1024), dtype=jnp.float32)   # (batch, samples)
    y = jax.random.normal(k2, (2, 1024), dtype=jnp.float32)

    loss_fn = DiffSTFT(srate, win_size)
    loss = loss_fn(out, y)
    jax.block_until_ready(loss)

    # Pure-JAX reference of the same math (two separate STFTs, like the module).
    basis = _stft_real_basis(win_size)
    s1 = jnp.matmul(_stft_frames(out, win_size), basis, precision="highest")
    s2 = jnp.matmul(_stft_frames(y, win_size), basis, precision="highest")
    ref = jnp.mean(jnp.square(out - y)) + jnp.sum(jnp.square(s1 - s2))
    assert jnp.allclose(loss, ref, rtol=1e-2, atol=1e-2), (loss, ref)

    print("KERNEL_OK")
</pallas_src>

<mosaic_0001>
module attributes {stable_mosaic.version = 11 : i64} {
  func.func @_mse_diff_kernel(%arg0: i32, %arg1: i32, %arg2: memref<16x128xf32, #tpu.memory_space<vmem>>, %arg3: memref<16x128xf32, #tpu.memory_space<vmem>>, %arg4: memref<16x128xf32, #tpu.memory_space<vmem>>, %arg5: memref<1x1xf32, #tpu.memory_space<smem>>, %arg6: memref<8x128xf32, #tpu.memory_space<vmem>>) attributes {dimension_semantics = [#tpu.dimension_semantics<arbitrary>, #tpu.dimension_semantics<arbitrary>], iteration_bounds = array<i64: 1, 1>, scalar_prefetch = 0 : i64, scratch_operands = 1 : i64, tpu.core_type = #tpu.core_type<tc>, window_params = [{transform_indices = @transform_0, window_bounds = array<i64: 16, 128>}, {transform_indices = @transform_1, window_bounds = array<i64: 16, 128>}, {transform_indices = @transform_2, window_bounds = array<i64: 16, 128>}, {transform_indices = @transform_3, window_bounds = array<i64: 1, 1>}]} {
    %c0_i32 = arith.constant 0 : i32
    %0 = arith.cmpi eq, %arg1, %c0_i32 : i32
    %1 = arith.extui %0 : i1 to i32
    %c0_i32_0 = arith.constant 0 : i32
    %2 = arith.cmpi ne, %1, %c0_i32_0 : i32
    scf.if %2 {
      %cst_12 = arith.constant 0.000000e+00 : f32
      %16 = vector.broadcast %cst_12 : f32 to vector<8x128xf32>
      %c0_13 = arith.constant 0 : index
      %c0_14 = arith.constant 0 : index
      %17 = vector.load %arg6[%c0_13, %c0_14] : memref<8x128xf32, #tpu.memory_space<vmem>>, vector<8x128xf32>
      tpu.vector_store %arg6[%c0_13, %c0_14], %16 {strides = array<i32>} : memref<8x128xf32, #tpu.memory_space<vmem>>, vector<8x128xf32>,
    } else {
    }
    %c0 = arith.constant 0 : index
    %c0_1 = arith.constant 0 : index
    %3 = vector.load %arg2[%c0, %c0_1] : memref<16x128xf32, #tpu.memory_space<vmem>>, vector<16x128xf32>
    %c0_2 = arith.constant 0 : index
    %c0_3 = arith.constant 0 : index
    %4 = vector.load %arg3[%c0_2, %c0_3] : memref<16x128xf32, #tpu.memory_space<vmem>>, vector<16x128xf32>
    %5 = arith.subf %3, %4 : vector<16x128xf32>
    %c0_4 = arith.constant 0 : index
    %c0_5 = arith.constant 0 : index
    %6 = vector.load %arg4[%c0_4, %c0_5] : memref<16x128xf32, #tpu.memory_space<vmem>>, vector<16x128xf32>
    tpu.vector_store %arg4[%c0_4, %c0_5], %5 {strides = array<i32>} : memref<16x128xf32, #tpu.memory_space<vmem>>, vector<16x128xf32>,
    %7 = arith.mulf %5, %5 : vector<16x128xf32>
    %8 = vector.shape_cast %7 : vector<16x128xf32> to vector<2x8x128xf32>
    %c0_6 = arith.constant 0 : index
    %c0_7 = arith.constant 0 : index
    %9 = vector.load %arg6[%c0_6, %c0_7] : memref<8x128xf32, #tpu.memory_space<vmem>>, vector<8x128xf32>
    %cst = arith.constant dense<0.000000e+00> : vector<8x128xf32>
    %10 = vector.multi_reduction <add>, %8, %cst [0] : vector<2x8x128xf32> to vector<8x128xf32>
    %11 = arith.addf %9, %10 : vector<8x128xf32>
    %c0_8 = arith.constant 0 : index
    %c0_9 = arith.constant 0 : index
    %12 = vector.load %arg6[%c0_8, %c0_9] : memref<8x128xf32, #tpu.memory_space<vmem>>, vector<8x128xf32>
    tpu.vector_store %arg6[%c0_8, %c0_9], %11 {strides = array<i32>} : memref<8x128xf32, #tpu.memory_space<vmem>>, vector<8x128xf32>,
    %c0_i32_10 = arith.constant 0 : i32
    %13 = arith.cmpi eq, %arg1, %c0_i32_10 : i32
    %14 = arith.extui %13 : i1 to i32
    %c0_i32_11 = arith.constant 0 : i32
    %15 = arith.cmpi ne, %14, %c0_i32_11 : i32
    scf.if %15 {
      %c0_12 = arith.constant 0 : index
      %c0_13 = arith.constant 0 : index
      %16 = vector.load %arg6[%c0_12, %c0_13] : memref<8x128xf32, #tpu.memory_space<vmem>>, vector<8x128xf32>
      %17 = vector.shape_cast %16 : vector<8x128xf32> to vector<1x8x128xf32>
      %cst_14 = arith.constant dense<0.000000e+00> : vector<1xf32>
      %18 = vector.multi_reduction <add>, %17, %cst_14 [1, 2] : vector<1x8x128xf32> to vector<1xf32>
      %19 = vector.shape_cast %18 : vector<1xf32> to vector<1x1x1xf32>
      %20 = vector.extract %19[0, 0, 0] : f32 from vector<1x1x1xf32>
      %cst_15 = arith.constant 4.8828125E-4 : f32
      %21 = arith.mulf %20, %cst_15 : f32
      %c0_16 = arith.constant 0 : index
      %c0_17 = arith.constant 0 : index
      %22 = memref.load %arg5[%c0_16, %c0_17] : memref<1x1xf32, #tpu.memory_space<smem>>
      memref.store %21, %arg5[%c0_16, %c0_17] : memref<1x1xf32, #tpu.memory_space<smem>>
    } else {
    }
    return
  }
  func.func @transform_0(%arg0: i32, %arg1: i32) -> (i32, i32) {
    %c1_i32 = arith.constant 1 : i32
    %0 = arith.muli %arg0, %c1_i32 : i32
    %1 = arith.addi %0, %arg1 : i32
    %c0_i32 = arith.constant 0 : i32
    %2 = arith.minsi %1, %c0_i32 : i32
    %c0_i32_0 = arith.constant 0 : i32
    %c0_i32_1 = arith.constant 0 : i32
    return %2, %c0_i32_0 : i32, i32
  }
  func.func @transform_1(%arg0: i32, %arg1: i32) -> (i32, i32) {
    %c1_i32 = arith.constant 1 : i32
    %0 = arith.muli %arg0, %c1_i32 : i32
    %1 = arith.addi %0, %arg1 : i32
    %c0_i32 = arith.constant 0 : i32
    %2 = arith.minsi %1, %c0_i32 : i32
    %c0_i32_0 = arith.constant 0 : i32
    %c0_i32_1 = arith.constant 0 : i32
    return %2, %c0_i32_0 : i32, i32
  }
  func.func @transform_2(%arg0: i32, %arg1: i32) -> (i32, i32) {
    %c1_i32 = arith.constant 1 : i32
    %0 = arith.muli %arg0, %c1_i32 : i32
    %1 = arith.addi %0, %arg1 : i32
    %c0_i32 = arith.constant 0 : i32
    %2 = arith.minsi %1, %c0_i32 : i32
    %c0_i32_0 = arith.constant 0 : i32
    %c0_i32_1 = arith.constant 0 : i32
    return %2, %c0_i32_0 : i32, i32
  }
  func.func @transform_3(%arg0: i32, %arg1: i32) -> (i32, i32) {
    %c0_i32 = arith.constant 0 : i32
    %c0_i32_0 = arith.constant 0 : i32
    return %arg0, %c0_i32 : i32, i32
  }
}

</mosaic_0001>

<llo_original>
// kernel: tpu_custom_call.1
$region0: #{tpu_custom_call.1}
  #allocation0 [shape = 'u32[]', space=smem, size = 0x4, offset = 0x4, fixed_abs, tag = 'smem constant byte address 0x4 - core index']
  #allocation1 [shape = 'u32[72,128]{1,0:T(1,128)}', space=vmem, size = 0x9000, scoped, tag = 'internal scratch']
  #allocation2 [shape = 'f32[8,128]{1,0:T(8,128)}', space=vmem, size = 0x1000, scoped, tag = 'scratch operand']
  %s0 = inlined_call_operand.hbm [shape: f32[16,128], index: 0, kind: input, shape index: {}]
  %s1 = inlined_call_operand.hbm [shape: f32[16,128], index: 1, kind: input, shape index: {}]
  %s2 = inlined_call_operand.hbm [shape: f32[16,128], index: 2, kind: output, shape index: {0}]
  %s3 = inlined_call_operand.hbm [shape: f32[1,1], index: 3, kind: output, shape index: {1}]
  %4 = xla_tuple %s2, %s3
  %s5 = sld [smem:[#allocation0]]
  $region42: #{tpu_custom_call.1} parent=0
    _
  %s7 = ssub.s32 1, %s5
  %s8 = scalar_select 0, %s7, %s5
  $region1: #{tpu_custom_call.1} parent=0
    #allocation3 [shape = 'u8[8192]{0}', space=vmem, size = 0x2000, scoped, tag = 'input window, operand 0, single buffered']
    #allocation4 [shape = 's32[1]{0}', space=sflag, size = 0x4, scoped, tag = 'scoped memory for tpu_custom_call.1']
    #allocation5 [shape = 's32[1]{0}', space=sflag, size = 0x4, scoped, tag = 'scoped memory for tpu_custom_call.1']
    #allocation6 [shape = 's32[1]{0}', space=sflag, size = 0x4, scoped, tag = 'scoped memory for tpu_custom_call.1']
    #allocation7 [shape = 'u8[8192]{0}', space=vmem, size = 0x2000, scoped, tag = 'input window, operand 1, single buffered']
    #allocation8 [shape = 's32[1]{0}', space=sflag, size = 0x4, scoped, tag = 'scoped memory for tpu_custom_call.1']
    #allocation9 [shape = 'u8[8192]{0}', space=vmem, size = 0x2000, scoped, tag = 'output window, operand 0, single buffered']
    #allocation10 [shape = 'u8[512]{0}', space=smem, size = 0x200, scoped, tag = 'output window, operand 1, single buffered']
    %9 = vsyncpa [#allocation4], 0
    %10 = vsyncpa [#allocation8], 0
    %11 = vsyncpa [#allocation5], 0
    %12 = vsyncpa [#allocation6], 0
    // Predicated region
    $region2: #{tpu_custom_call.1} parent=1 // pred_check
      _
    $region3: #{tpu_custom_call.1} parent=1 // pred_check_branch
      %14 = sbr.rel (0) target = $region5
    $region4: #{tpu_custom_call.1} parent=1 // pred_region
      %s15 = sadd.s32 0, 0
      %p16 = scmp.lt.s32.totalorder %s15, 0
      %s17 = scalar_select %p16, %s15, 0
      %s18 = smul.u32 2, %s17
      %20 = vsyncadd [#allocation4], 0
      %s21 = smul.addr %s18, 8
      %s22 = scalar_lea.hbm %s0, %s21
      %s23 = sshll.u32 %s22, 4
      %s24 = int_to_ptr.hbm [resolvable:$true] %s23
      %s25 = sshll.u32 [#allocation3], 4
      %s26 = int_to_ptr.vmem [resolvable:$true] %s25
      %31 = dma.hbm_to_vmem [thread:$0]  %s24, 256, %s26, [#allocation4], 128, 128, 8
    $region5: #{tpu_custom_call.1} parent=1 // pred_fallthru
      _
    // Predicated region
    $region6: #{tpu_custom_call.1} parent=1 // pred_check
      _
    $region7: #{tpu_custom_call.1} parent=1 // pred_check_branch
      %33 = sbr.rel (0) target = $region9
    $region8: #{tpu_custom_call.1} parent=1 // pred_region
      %s34 = sadd.s32 0, 0
      %p35 = scmp.lt.s32.totalorder %s34, 0
      %s36 = scalar_select %p35, %s34, 0
      %s37 = smul.u32 2, %s36
      %39 = vsyncadd [#allocation8], 0
      %s40 = smul.addr %s37, 8
      %s41 = scalar_lea.hbm %s1, %s40
      %s42 = sshll.u32 %s41, 4
      %s43 = int_to_ptr.hbm [resolvable:$true] %s42
      %s44 = sshll.u32 [#allocation7], 4
      %s45 = int_to_ptr.vmem [resolvable:$true] %s44
      %50 = dma.hbm_to_vmem [thread:$0]  %s43, 256, %s45, [#allocation8], 128, 128, 8
    $region9: #{tpu_custom_call.1} parent=1 // pred_fallthru
      _
    // Predicated region
    $region10: #{tpu_custom_call.1} parent=1 // pred_check
      _
    $region11: #{tpu_custom_call.1} parent=1 // pred_check_branch
      %52 = sbr.rel (0) target = $region13
    $region12: #{tpu_custom_call.1} parent=1 // pred_region
      %54 = dma.done [#allocation4], 256
    $region13: #{tpu_custom_call.1} parent=1 // pred_fallthru
      _
    // Predicated region
    $region14: #{tpu_custom_call.1} parent=1 // pred_check
      _
    $region15: #{tpu_custom_call.1} parent=1 // pred_check_branch
      %56 = sbr.rel (0) target = $region17
    $region16: #{tpu_custom_call.1} parent=1 // pred_region
      %58 = dma.done [#allocation8], 256
    $region17: #{tpu_custom_call.1} parent=1 // pred_fallthru
      _
    %s59 = sadd.s32 0, 0
    %p60 = scmp.lt.s32.totalorder %s59, 0
    %s61 = scalar_select %p60, %s59, 0
    %s62 = smul.u32 2, %s61
    %s63 = sadd.s32 0, 0
    %p64 = scmp.lt.s32.totalorder %s63, 0
    %s65 = scalar_select %p64, %s63, 0
    %s66 = smul.u32 2, %s65
    %s67 = sadd.s32 0, 0
    %p68 = scmp.lt.s32.totalorder %s67, 0
    %s69 = scalar_select %p68, %s67, 0
    %s70 = smul.u32 2, %s69
    %p71 = scmp.eq.s32.totalorder 0, 0
    // Predicated region
    $region18: #{tpu_custom_call.1} parent=1 // pred_check
      %p72 = pneg %p71
    $region19: #{tpu_custom_call.1} parent=1 // pred_check_branch
      %74 = sbr.rel (%p72) target = $region21
    $region20: #{tpu_custom_call.1} parent=1 // pred_region
      %75 = vst [vmem:[#allocation2] sm:$0xff] 0.0
    $region21: #{tpu_custom_call.1} parent=1 // pred_fallthru
      _
    %v76 = vld [vmem:[#allocation3] sm:$0xff]
    %v77 = vld [vmem:[#allocation3 + $0x8] sm:$0xff]
    %v78 = vld [vmem:[#allocation7] sm:$0xff]
    %v79 = vld [vmem:[#allocation7 + $0x8] sm:$0xff]
    %v80 = vsub.f32 %v76, %v78
    %v81 = vsub.f32 %v77, %v79
    %82 = vst [vmem:[#allocation9] sm:$0xff] %v80
    %83 = vst [vmem:[#allocation9 + $0x8] sm:$0xff] %v81
    %v84 = vmul.f32 %v80, %v80
    %v85 = vmul.f32 %v81, %v81
    %v86 = vld [vmem:[#allocation2] sm:$0xff]
    %v87 = vadd.f32 %v84, %v85
    %v88 = vadd.f32 %v86, %v87
    %89 = vst [vmem:[#allocation2] sm:$0xff] %v88
    // Predicated region
    $region22: #{tpu_custom_call.1} parent=1 // pred_check
      %p90 = pneg %p71
    $region23: #{tpu_custom_call.1} parent=1 // pred_check_branch
      %92 = sbr.rel (%p90) target = $region25
    $region24: #{tpu_custom_call.1} parent=1 // pred_region
      %v93 = vld [vmem:[#allocation2] sm:$0xff]
      %94 = vadd.xlane.f32.xlu0 %v93
      %v95 = vpop.xlane.xlu0 %94
      %v96 = vrot.slane %v95, 4
      %v97 = vadd.f32 %v95, %v96
      %v98 = vrot.slane %v97, 2
      %v99 = vadd.f32 %v97, %v98
      %v100 = vrot.slane %v99, 1
      %v101 = vadd.f32 %v99, %v100
      %s102 = vtos %v101
      %s103 = smul.f32 %s102, 0.00048828125
      %s104 = scalar_lea.smem [#allocation10], 0
      %105 = sst [smem:[%s104]] %s103
    $region25: #{tpu_custom_call.1} parent=1 // pred_fallthru
      _
    // Predicated region
    $region26: #{tpu_custom_call.1} parent=1 // pred_check
      _
    $region27: #{tpu_custom_call.1} parent=1 // pred_check_branch
      %107 = sbr.rel (0) target = $region29
    $region28: #{tpu_custom_call.1} parent=1 // pred_region
      %s108 = sadd.s32 0, 0
      %p109 = scmp.lt.s32.totalorder %s108, 0
      %s110 = scalar_select %p109, %s108, 0
      %s111 = smul.u32 2, %s110
      %113 = vsyncadd [#allocation5], 0
      %s114 = smul.addr %s111, 8
      %s115 = scalar_lea.hbm %s2, %s114
      %s116 = sshll.u32 [#allocation9], 4
      %s117 = int_to_ptr.vmem [resolvable:$true] %s116
      %s118 = sshll.u32 %s115, 4
      %s119 = int_to_ptr.hbm [resolvable:$true] %s118
      %124 = dma.vmem_to_hbm [thread:$0]  %s117, 256, %s119, [#allocation5], 128, 128, 8
    $region29: #{tpu_custom_call.1} parent=1 // pred_fallthru
      _
    // Predicated region
    $region30: #{tpu_custom_call.1} parent=1 // pred_check
      _
    $region31: #{tpu_custom_call.1} parent=1 // pred_check_branch
      %126 = sbr.rel (0) target = $region33
    $region32: #{tpu_custom_call.1} parent=1 // pred_region
      %128 = vsyncadd [#allocation6], 0
      %s130 = sshll.u32 %s3, 4
      %s131 = int_to_ptr.hbm [resolvable:$true] %s130
      %133 = dma.smem_to_hbm [#allocation10], 16, %s131, [#allocation6]
    $region33: #{tpu_custom_call.1} parent=1 // pred_fallthru
      _
    // Predicated region
    $region34: #{tpu_custom_call.1} parent=1 // pred_check
      _
    $region35: #{tpu_custom_call.1} parent=1 // pred_check_branch
      %135 = sbr.rel (0) target = $region37
    $region36: #{tpu_custom_call.1} parent=1 // pred_region
      %137 = dma.done [#allocation5], 256
    $region37: #{tpu_custom_call.1} parent=1 // pred_fallthru
      _
    // Predicated region
    $region38: #{tpu_custom_call.1} parent=1 // pred_check
      _
    $region39: #{tpu_custom_call.1} parent=1 // pred_check_branch
      %139 = sbr.rel (0) target = $region41
    $region40: #{tpu_custom_call.1} parent=1 // pred_region
      %141 = dma.done [#allocation6], 16
    $region41: #{tpu_custom_call.1} parent=1 // pred_fallthru
      _
    %142 = sfence
    %143 = vsyncpa [#allocation4], 1
    %144 = vsyncpa [#allocation8], 1
    %145 = vsyncpa [#allocation5], 1
    %146 = vsyncpa [#allocation6], 1

</llo_original>
